<compile_context>
chip_gen: v6e
topology: v6e:2x2x1
jax: 0.10.0
libtpu: 0.0.40
codegen_flags: <defaults>
</compile_context>

<pallas_src>
import functools

import jax
import jax.numpy as jnp
from jax.experimental import pallas as pl
from jax.experimental.pallas import tpu as pltpu

BN_EPS = 1e-5


# ---------------------------------------------------------------------------
# Packed-parameter column layout (shared by build_params and the kernel).
# ---------------------------------------------------------------------------
def _param_layout(c1, ch, c2):
    slots = (("w1", c1, 3 * c1), ("b1", c1, 1),
             ("w2", ch, c1),     ("b2", ch, 1),
             ("w3", ch, 3),      ("b3", ch, 1),
             ("w4", c2, ch),     ("b4", c2, 1),
             ("w5", c2, 3 * c2), ("b5", c2, 1))
    offs, col = {}, 0
    for name, rows, cols in slots:
        offs[name] = (rows, col, cols)
        col += cols
    return offs, col


# ---------------------------------------------------------------------------
# One-time probe: rotate direction (and availability) of pltpu.roll for the
# exact lane roll used by the kernel.  Returns (up_shift, dn_shift) or None.
# ---------------------------------------------------------------------------
@functools.lru_cache(maxsize=None)
def _probe_roll(w, hw):
    def probe_kernel(x_ref, o_ref):
        o_ref[...] = pltpu.roll(x_ref[...], w, axis=1)

    try:
        x = jax.lax.broadcasted_iota(jnp.float32, (4, hw), 1)
        y = pl.pallas_call(
            probe_kernel,
            out_shape=jax.ShapeDtypeStruct((4, hw), jnp.float32))(x)
        first = float(jax.device_get(y)[0, 0])
    except Exception:
        return None                      # roll unavailable -> slice fallback
    if first == float(hw - w):
        return w, hw - w                 # np.roll semantics: out[p] = x[p - s]
    if first == float(w):
        return hw - w, w                 # opposite rotate direction
    return None                          # unknown semantics -> slice fallback


# ---------------------------------------------------------------------------
# Pallas kernel: whole cv1 pipeline (+ residual) for one image [C, H*W].
# ---------------------------------------------------------------------------
def _cond_identity_kernel(x_ref, p_ref, o_ref, *, add, w_stride, roll_shifts,
                          offs):
    x = x_ref[...].astype(jnp.float32)        # [C1, H*W]   (lane-dense)
    p = p_ref[...].astype(jnp.float32)        # [Cmax, PCOLS] packed params
    hw = x.shape[-1]

    def get(name):
        rows, off, cols = offs[name]
        return p[:rows, off:off + cols]

    def silu(v):
        return v * jax.nn.sigmoid(v)

    def shifts(v):
        # v[:, p] indexes flattened (h, w) with p = h*W + w; a +-1 shift along
        # H is a lane roll by +-W plus zeroing of the padded border rows.
        c = v.shape[0]
        if roll_shifts is not None:
            up_s, dn_s = roll_shifts
            lane = jax.lax.broadcasted_iota(jnp.int32, (c, hw), 1)
            up = jnp.where(lane >= w_stride, pltpu.roll(v, up_s, axis=1), 0.0)
            dn = jnp.where(lane < hw - w_stride,
                           pltpu.roll(v, dn_s, axis=1), 0.0)
        else:  # conservative fallback: slice + zero-pad (still lane-dense)
            zero = jnp.zeros((c, w_stride), v.dtype)
            up = jnp.concatenate([zero, v[:, :hw - w_stride]], axis=1)
            dn = jnp.concatenate([v[:, w_stride:], zero], axis=1)
        return up, dn

    def mix(w, xs):
        # y = w @ concat(xs, axis=0): weights as LHS so spatial stays on lanes.
        # Tiny channel counts -> unrolled VPU broadcast-MACs (skip the MXU);
        # larger -> one fused MXU matmul (all taps share a single K dim).
        cout = w.shape[0]
        if cout <= 8 and all(v.shape[0] <= 8 for v in xs):
            acc, col = None, 0
            for v in xs:
                for ci in range(v.shape[0]):
                    term = w[:, col:col + 1] * v[ci:ci + 1, :]
                    acc = term if acc is None else acc + term
                    col += 1
            return acc
        xcat = xs[0] if len(xs) == 1 else jnp.concatenate(xs, axis=0)
        return jnp.dot(w, xcat, preferred_element_type=jnp.float32)

    def dense3x1(v, w, b):                 # Conv(c, c, (3,1)), BN folded
        up, dn = shifts(v)
        return mix(w, (up, v, dn)) + b

    def conv1x1(v, w, b):                  # Conv(cin, cout, 1), BN folded
        return mix(w, (v,)) + b

    def dw3x1(v, w, b):                    # Conv(c, c, (3,1), g=c), BN folded
        up, dn = shifts(v)
        return up * w[:, 0:1] + v * w[:, 1:2] + dn * w[:, 2:3] + b

    y = silu(dense3x1(x, get("w1"), get("b1")))     # [C1, HW]
    y = silu(conv1x1(y, get("w2"), get("b2")))      # [Ch, HW]
    y = silu(dw3x1(y, get("w3"), get("b3")))        # [Ch, HW]
    y = silu(conv1x1(y, get("w4"), get("b4")))      # [C2, HW]
    y = silu(dense3x1(y, get("w5"), get("b5")))     # [C2, HW]
    if add:
        y = y + x
    o_ref[...] = y.astype(o_ref.dtype)


# ---------------------------------------------------------------------------
# Wrapper
# ---------------------------------------------------------------------------
def conditional_identity_pallas(x_nchw, pslab, dims, add):
    N, C1, H, W = x_nchw.shape
    c1, ch, c2 = dims
    assert c1 == C1
    HW = H * W

    xk = x_nchw.reshape(N, C1, HW)          # free view: no HBM transpose pass
    offs, pcols = _param_layout(c1, ch, c2)
    cmax = pslab.shape[0]
    roll_shifts = _probe_roll(W, HW)

    kernel = functools.partial(
        _cond_identity_kernel, add=add, w_stride=W,
        roll_shifts=roll_shifts, offs=offs)

    out = pl.pallas_call(
        kernel,
        out_shape=jax.ShapeDtypeStruct((N, c2, HW), x_nchw.dtype),
        # One full image per step: largest halo-free tile for this problem and
        # still >= 2 grid steps (v7x megacore can shard the "parallel" axis).
        grid=(N,),
        in_specs=[
            pl.BlockSpec((None, C1, HW), lambda i: (i, 0, 0)),
            pl.BlockSpec((cmax, pcols), lambda i: (0, 0)),
        ],
        out_specs=pl.BlockSpec((None, c2, HW), lambda i: (i, 0, 0)),
        compiler_params=pltpu.CompilerParams(
            dimension_semantics=("parallel",),
            vmem_limit_bytes=32 * 1024 * 1024),   # fits v5e/v6e/v7x budgets
    )(xk, pslab)

    return out.reshape(N, c2, H, W)         # free view back to NCHW


# ---------------------------------------------------------------------------
# Deterministic parameter construction (PyTorch-shaped conv + BN, BN folded),
# packed into one [Cmax, total_cols] slab for the kernel.
# ---------------------------------------------------------------------------
def make_fused_conv(key, cin, cout, kh, groups):
    k1, k2, k3, k4, k5 = jax.random.split(key, 5)
    w = jax.random.normal(k1, (cout, cin // groups, kh, 1), jnp.float32) * 0.1
    gamma = jax.random.uniform(k2, (cout,), jnp.float32, 0.5, 1.5)
    beta = jax.random.normal(k3, (cout,), jnp.float32) * 0.1
    mean = jax.random.normal(k4, (cout,), jnp.float32) * 0.1
    var = jax.random.uniform(k5, (cout,), jnp.float32, 0.5, 1.5)
    scale = gamma / jnp.sqrt(var + BN_EPS)
    w_f = w * scale[:, None, None, None]
    b_f = beta - mean * scale
    return w_f, b_f                        # PyTorch OIHW weight + bias (BN folded)


def build_params(key, c1, c2, e=0.5):
    ch = 2 * int(c2 * e)
    keys = jax.random.split(key, 5)
    w1, b1 = make_fused_conv(keys[0], c1, c1, 3, 1)        # Conv(c1, c1, (3,1))
    w2, b2 = make_fused_conv(keys[1], c1, ch, 1, 1)        # Conv(c1, 2c_, 1)
    w3, b3 = make_fused_conv(keys[2], ch, ch, 3, ch)       # Conv(2c_, 2c_, (3,1), g)
    w4, b4 = make_fused_conv(keys[3], ch, c2, 1, 1)        # Conv(2c_, c2, 1)
    w5, b5 = make_fused_conv(keys[4], c2, c2, 3, 1)        # Conv(c2, c2, (3,1))
    torch_params = (w1, b1, w2, b2, w3, b3, w4, b4, w5, b5)

    # Kernel-layout weights: W as LHS ([Cout, ...]); dense (3,1) taps stacked
    # tap-major so column index = t*Cin + ci matches the kernel's MAC order.
    w1s = jnp.transpose(w1[..., 0], (0, 2, 1)).reshape(c1, 3 * c1)
    w2k = w2[:, :, 0, 0]                                   # [Ch, C1]
    w3k = w3[:, 0, :, 0]                                   # [Ch, 3]
    w4k = w4[:, :, 0, 0]                                   # [C2, Ch]
    w5s = jnp.transpose(w5[..., 0], (0, 2, 1)).reshape(c2, 3 * c2)

    offs, pcols = _param_layout(c1, ch, c2)
    cmax = max(c1, ch, c2)
    mats = {"w1": w1s, "b1": b1[:, None], "w2": w2k, "b2": b2[:, None],
            "w3": w3k, "b3": b3[:, None], "w4": w4k, "b4": b4[:, None],
            "w5": w5s, "b5": b5[:, None]}
    slab = jnp.zeros((cmax, pcols), jnp.float32)
    for name, (rows, off, cols) in offs.items():
        slab = slab.at[:rows, off:off + cols].set(mats[name])
    return torch_params, slab, (c1, ch, c2)


# ---------------------------------------------------------------------------
# Pure-JAX NCHW reference (mirrors the PyTorch module in eval mode).
# ---------------------------------------------------------------------------
def ref_forward(x, torch_params, ch, add):
    (w1, b1, w2, b2, w3, b3, w4, b4, w5, b5) = torch_params

    def conv_bn_silu(v, w, b, groups, pad_h):
        y = jax.lax.conv_general_dilated(
            v, w, window_strides=(1, 1),
            padding=((pad_h, pad_h), (0, 0)),
            feature_group_count=groups,
            dimension_numbers=("NCHW", "OIHW", "NCHW"))
        y = y + b[None, :, None, None]
        return y * jax.nn.sigmoid(y)

    y = conv_bn_silu(x, w1, b1, 1, 1)
    y = conv_bn_silu(y, w2, b2, 1, 0)
    y = conv_bn_silu(y, w3, b3, ch, 1)
    y = conv_bn_silu(y, w4, b4, 1, 0)
    y = conv_bn_silu(y, w5, b5, 1, 1)
    return x + y if add else y


if __name__ == "__main__":
    # Small shapes consistent with the module: ConditionalIdentity(c1=4, c2=4)
    N, C1, C2, H, W = 2, 4, 4, 16, 16
    shortcut = True
    add = shortcut and (C1 == C2)

    key = jax.random.PRNGKey(0)
    kx, kp = jax.random.split(key)
    x = jax.random.normal(kx, (N, C1, H, W), jnp.float32)

    torch_params, pslab, dims = build_params(kp, C1, C2, e=0.5)

    out = conditional_identity_pallas(x, pslab, dims, add=add)
    out = jax.block_until_ready(out)

    ref = jax.block_until_ready(ref_forward(x, torch_params, dims[1], add))
    assert out.shape == (N, C2, H, W)
    err = float(jnp.max(jnp.abs(out - ref)))
    assert jnp.allclose(out, ref, rtol=1e-4, atol=1e-4), f"max abs err {err}"

    # TODO(synk): train-mode BatchNorm (batch statistics / running-stat updates)
    # is not modeled; BN is folded into conv weights as in inference/fuse().
    print("KERNEL_OK")
</pallas_src>

<mosaic_0001>
module attributes {stable_mosaic.version = 11 : i64} {
  func.func @probe_kernel(%arg0: memref<4x256xf32, #tpu.memory_space<vmem>>, %arg1: memref<4x256xf32, #tpu.memory_space<vmem>>) attributes {dimension_semantics = [], scalar_prefetch = 0 : i64, scratch_operands = 0 : i64, tpu.core_type = #tpu.core_type<tc>} {
    %c0 = arith.constant 0 : index
    %c0_0 = arith.constant 0 : index
    %0 = vector.load %arg0[%c0, %c0_0] : memref<4x256xf32, #tpu.memory_space<vmem>>, vector<4x256xf32>
    %c16_i32 = arith.constant 16 : i32
    %1 = tpu.dynamic_rotate %0 by %c16_i32 dim 1 : vector<4x256xf32>, i32 -> vector<4x256xf32>
    %c0_1 = arith.constant 0 : index
    %c0_2 = arith.constant 0 : index
    %2 = vector.load %arg1[%c0_1, %c0_2] : memref<4x256xf32, #tpu.memory_space<vmem>>, vector<4x256xf32>
    tpu.vector_store %arg1[%c0_1, %c0_2], %1 {strides = array<i32>} : memref<4x256xf32, #tpu.memory_space<vmem>>, vector<4x256xf32>,
    return
  }
}

module attributes {stable_mosaic.version = 11 : i64} {
  func.func @_cond_identity_kernel(%arg0: i32, %arg1: memref<1x4x256xf32, #tpu.memory_space<vmem>>, %arg2: memref<4x40xf32, #tpu.memory_space<vmem>>, %arg3: memref<1x4x256xf32, #tpu.memory_space<vmem>>) attributes {dimension_semantics = [#tpu.dimension_semantics<parallel>], iteration_bounds = array<i64: 2>, scalar_prefetch = 0 : i64, scratch_operands = 0 : i64, tpu.core_type = #tpu.core_type<tc>, window_params = [{transform_indices = @transform_0, window_bounds = array<i64: 1, 4, 256>}, {pipeline_mode = #tpu.pipeline_mode<synchronous>, transform_indices = @transform_1, window_bounds = array<i64: 4, 40>}, {transform_indices = @transform_2, window_bounds = array<i64: 1, 4, 256>}]} {
    %c0 = arith.constant 0 : index
    %c0_0 = arith.constant 0 : index
    %c0_1 = arith.constant 0 : index
    %0 = vector.load %arg1[%c0, %c0_0, %c0_1] : memref<1x4x256xf32, #tpu.memory_space<vmem>>, vector<1x4x256xf32>
    %1 = vector.shape_cast %0 : vector<1x4x256xf32> to vector<4x256xf32>
    %c0_2 = arith.constant 0 : index
    %c0_3 = arith.constant 0 : index
    %2 = vector.load %arg2[%c0_2, %c0_3] : memref<4x40xf32, #tpu.memory_space<vmem>>, vector<4x40xf32>
    %3 = vector.extract_strided_slice %2 {offsets = [0, 0], sizes = [4, 12], strides = [1, 1]} : vector<4x40xf32> to vector<4x12xf32>
    %4 = vector.extract_strided_slice %2 {offsets = [0, 12], sizes = [4, 1], strides = [1, 1]} : vector<4x40xf32> to vector<4x1xf32>
    %cst = arith.constant 0.000000e+00 : f32
    %5 = vector.broadcast %cst : f32 to vector<4x16xf32>
    %6 = vector.extract_strided_slice %1 {offsets = [0, 0], sizes = [4, 240], strides = [1, 1]} : vector<4x256xf32> to vector<4x240xf32>
    %7 = tpu.concatenate %5, %6 in 1 : vector<4x16xf32>, vector<4x240xf32> -> vector<4x256xf32>
    %8 = vector.extract_strided_slice %1 {offsets = [0, 16], sizes = [4, 240], strides = [1, 1]} : vector<4x256xf32> to vector<4x240xf32>
    %9 = tpu.concatenate %8, %5 in 1 : vector<4x240xf32>, vector<4x16xf32> -> vector<4x256xf32>
    %10 = vector.extract_strided_slice %3 {offsets = [0, 0], sizes = [4, 1], strides = [1, 1]} : vector<4x12xf32> to vector<4x1xf32>
    %11 = vector.extract_strided_slice %7 {offsets = [0, 0], sizes = [1, 256], strides = [1, 1]} : vector<4x256xf32> to vector<1x256xf32>
    %12 = vector.broadcast %10 : vector<4x1xf32> to vector<4x256xf32>
    %13 = vector.broadcast %11 : vector<1x256xf32> to vector<4x256xf32>
    %14 = arith.mulf %12, %13 : vector<4x256xf32>
    %15 = vector.extract_strided_slice %3 {offsets = [0, 1], sizes = [4, 1], strides = [1, 1]} : vector<4x12xf32> to vector<4x1xf32>
    %16 = vector.extract_strided_slice %7 {offsets = [1, 0], sizes = [1, 256], strides = [1, 1]} : vector<4x256xf32> to vector<1x256xf32>
    %17 = vector.broadcast %15 : vector<4x1xf32> to vector<4x256xf32>
    %18 = vector.broadcast %16 : vector<1x256xf32> to vector<4x256xf32>
    %19 = arith.mulf %17, %18 : vector<4x256xf32>
    %20 = arith.addf %14, %19 : vector<4x256xf32>
    %21 = vector.extract_strided_slice %3 {offsets = [0, 2], sizes = [4, 1], strides = [1, 1]} : vector<4x12xf32> to vector<4x1xf32>
    %22 = vector.extract_strided_slice %7 {offsets = [2, 0], sizes = [1, 256], strides = [1, 1]} : vector<4x256xf32> to vector<1x256xf32>
    %23 = vector.broadcast %21 : vector<4x1xf32> to vector<4x256xf32>
    %24 = vector.broadcast %22 : vector<1x256xf32> to vector<4x256xf32>
    %25 = arith.mulf %23, %24 : vector<4x256xf32>
    %26 = arith.addf %20, %25 : vector<4x256xf32>
    %27 = vector.extract_strided_slice %3 {offsets = [0, 3], sizes = [4, 1], strides = [1, 1]} : vector<4x12xf32> to vector<4x1xf32>
    %28 = vector.extract_strided_slice %7 {offsets = [3, 0], sizes = [1, 256], strides = [1, 1]} : vector<4x256xf32> to vector<1x256xf32>
    %29 = vector.broadcast %27 : vector<4x1xf32> to vector<4x256xf32>
    %30 = vector.broadcast %28 : vector<1x256xf32> to vector<4x256xf32>
    %31 = arith.mulf %29, %30 : vector<4x256xf32>
    %32 = arith.addf %26, %31 : vector<4x256xf32>
    %33 = vector.extract_strided_slice %3 {offsets = [0, 4], sizes = [4, 1], strides = [1, 1]} : vector<4x12xf32> to vector<4x1xf32>
    %34 = vector.extract_strided_slice %1 {offsets = [0, 0], sizes = [1, 256], strides = [1, 1]} : vector<4x256xf32> to vector<1x256xf32>
    %35 = vector.broadcast %33 : vector<4x1xf32> to vector<4x256xf32>
    %36 = vector.broadcast %34 : vector<1x256xf32> to vector<4x256xf32>
    %37 = arith.mulf %35, %36 : vector<4x256xf32>
    %38 = arith.addf %32, %37 : vector<4x256xf32>
    %39 = vector.extract_strided_slice %3 {offsets = [0, 5], sizes = [4, 1], strides = [1, 1]} : vector<4x12xf32> to vector<4x1xf32>
    %40 = vector.extract_strided_slice %1 {offsets = [1, 0], sizes = [1, 256], strides = [1, 1]} : vector<4x256xf32> to vector<1x256xf32>
    %41 = vector.broadcast %39 : vector<4x1xf32> to vector<4x256xf32>
    %42 = vector.broadcast %40 : vector<1x256xf32> to vector<4x256xf32>
    %43 = arith.mulf %41, %42 : vector<4x256xf32>
    %44 = arith.addf %38, %43 : vector<4x256xf32>
    %45 = vector.extract_strided_slice %3 {offsets = [0, 6], sizes = [4, 1], strides = [1, 1]} : vector<4x12xf32> to vector<4x1xf32>
    %46 = vector.extract_strided_slice %1 {offsets = [2, 0], sizes = [1, 256], strides = [1, 1]} : vector<4x256xf32> to vector<1x256xf32>
    %47 = vector.broadcast %45 : vector<4x1xf32> to vector<4x256xf32>
    %48 = vector.broadcast %46 : vector<1x256xf32> to vector<4x256xf32>
    %49 = arith.mulf %47, %48 : vector<4x256xf32>
    %50 = arith.addf %44, %49 : vector<4x256xf32>
    %51 = vector.extract_strided_slice %3 {offsets = [0, 7], sizes = [4, 1], strides = [1, 1]} : vector<4x12xf32> to vector<4x1xf32>
    %52 = vector.extract_strided_slice %1 {offsets = [3, 0], sizes = [1, 256], strides = [1, 1]} : vector<4x256xf32> to vector<1x256xf32>
    %53 = vector.broadcast %51 : vector<4x1xf32> to vector<4x256xf32>
    %54 = vector.broadcast %52 : vector<1x256xf32> to vector<4x256xf32>
    %55 = arith.mulf %53, %54 : vector<4x256xf32>
    %56 = arith.addf %50, %55 : vector<4x256xf32>
    %57 = vector.extract_strided_slice %3 {offsets = [0, 8], sizes = [4, 1], strides = [1, 1]} : vector<4x12xf32> to vector<4x1xf32>
    %58 = vector.extract_strided_slice %9 {offsets = [0, 0], sizes = [1, 256], strides = [1, 1]} : vector<4x256xf32> to vector<1x256xf32>
    %59 = vector.broadcast %57 : vector<4x1xf32> to vector<4x256xf32>
    %60 = vector.broadcast %58 : vector<1x256xf32> to vector<4x256xf32>
    %61 = arith.mulf %59, %60 : vector<4x256xf32>
    %62 = arith.addf %56, %61 : vector<4x256xf32>
    %63 = vector.extract_strided_slice %3 {offsets = [0, 9], sizes = [4, 1], strides = [1, 1]} : vector<4x12xf32> to vector<4x1xf32>
    %64 = vector.extract_strided_slice %9 {offsets = [1, 0], sizes = [1, 256], strides = [1, 1]} : vector<4x256xf32> to vector<1x256xf32>
    %65 = vector.broadcast %63 : vector<4x1xf32> to vector<4x256xf32>
    %66 = vector.broadcast %64 : vector<1x256xf32> to vector<4x256xf32>
    %67 = arith.mulf %65, %66 : vector<4x256xf32>
    %68 = arith.addf %62, %67 : vector<4x256xf32>
    %69 = vector.extract_strided_slice %3 {offsets = [0, 10], sizes = [4, 1], strides = [1, 1]} : vector<4x12xf32> to vector<4x1xf32>
    %70 = vector.extract_strided_slice %9 {offsets = [2, 0], sizes = [1, 256], strides = [1, 1]} : vector<4x256xf32> to vector<1x256xf32>
    %71 = vector.broadcast %69 : vector<4x1xf32> to vector<4x256xf32>
    %72 = vector.broadcast %70 : vector<1x256xf32> to vector<4x256xf32>
    %73 = arith.mulf %71, %72 : vector<4x256xf32>
    %74 = arith.addf %68, %73 : vector<4x256xf32>
    %75 = vector.extract_strided_slice %3 {offsets = [0, 11], sizes = [4, 1], strides = [1, 1]} : vector<4x12xf32> to vector<4x1xf32>
    %76 = vector.extract_strided_slice %9 {offsets = [3, 0], sizes = [1, 256], strides = [1, 1]} : vector<4x256xf32> to vector<1x256xf32>
    %77 = vector.broadcast %75 : vector<4x1xf32> to vector<4x256xf32>
    %78 = vector.broadcast %76 : vector<1x256xf32> to vector<4x256xf32>
    %79 = arith.mulf %77, %78 : vector<4x256xf32>
    %80 = arith.addf %74, %79 : vector<4x256xf32>
    %81 = vector.broadcast %4 : vector<4x1xf32> to vector<4x256xf32>
    %82 = arith.addf %80, %81 : vector<4x256xf32>
    %83 = arith.negf %82 : vector<4x256xf32>
    %84 = math.exp %83 : vector<4x256xf32>
    %cst_4 = arith.constant 1.000000e+00 : f32
    %85 = vector.broadcast %cst_4 : f32 to vector<4x256xf32>
    %86 = arith.addf %85, %84 : vector<4x256xf32>
    %87 = arith.divf %85, %86 : vector<4x256xf32>
    %88 = arith.mulf %82, %87 : vector<4x256xf32>
    %89 = vector.extract_strided_slice %2 {offsets = [0, 13], sizes = [4, 4], strides = [1, 1]} : vector<4x40xf32> to vector<4x4xf32>
    %90 = vector.extract_strided_slice %2 {offsets = [0, 17], sizes = [4, 1], strides = [1, 1]} : vector<4x40xf32> to vector<4x1xf32>
    %91 = vector.extract_strided_slice %89 {offsets = [0, 0], sizes = [4, 1], strides = [1, 1]} : vector<4x4xf32> to vector<4x1xf32>
    %92 = vector.extract_strided_slice %88 {offsets = [0, 0], sizes = [1, 256], strides = [1, 1]} : vector<4x256xf32> to vector<1x256xf32>
    %93 = vector.broadcast %91 : vector<4x1xf32> to vector<4x256xf32>
    %94 = vector.broadcast %92 : vector<1x256xf32> to vector<4x256xf32>
    %95 = arith.mulf %93, %94 : vector<4x256xf32>
    %96 = vector.extract_strided_slice %89 {offsets = [0, 1], sizes = [4, 1], strides = [1, 1]} : vector<4x4xf32> to vector<4x1xf32>
    %97 = vector.extract_strided_slice %88 {offsets = [1, 0], sizes = [1, 256], strides = [1, 1]} : vector<4x256xf32> to vector<1x256xf32>
    %98 = vector.broadcast %96 : vector<4x1xf32> to vector<4x256xf32>
    %99 = vector.broadcast %97 : vector<1x256xf32> to vector<4x256xf32>
    %100 = arith.mulf %98, %99 : vector<4x256xf32>
    %101 = arith.addf %95, %100 : vector<4x256xf32>
    %102 = vector.extract_strided_slice %89 {offsets = [0, 2], sizes = [4, 1], strides = [1, 1]} : vector<4x4xf32> to vector<4x1xf32>
    %103 = vector.extract_strided_slice %88 {offsets = [2, 0], sizes = [1, 256], strides = [1, 1]} : vector<4x256xf32> to vector<1x256xf32>
    %104 = vector.broadcast %102 : vector<4x1xf32> to vector<4x256xf32>
    %105 = vector.broadcast %103 : vector<1x256xf32> to vector<4x256xf32>
    %106 = arith.mulf %104, %105 : vector<4x256xf32>
    %107 = arith.addf %101, %106 : vector<4x256xf32>
    %108 = vector.extract_strided_slice %89 {offsets = [0, 3], sizes = [4, 1], strides = [1, 1]} : vector<4x4xf32> to vector<4x1xf32>
    %109 = vector.extract_strided_slice %88 {offsets = [3, 0], sizes = [1, 256], strides = [1, 1]} : vector<4x256xf32> to vector<1x256xf32>
    %110 = vector.broadcast %108 : vector<4x1xf32> to vector<4x256xf32>
    %111 = vector.broadcast %109 : vector<1x256xf32> to vector<4x256xf32>
    %112 = arith.mulf %110, %111 : vector<4x256xf32>
    %113 = arith.addf %107, %112 : vector<4x256xf32>
    %114 = vector.broadcast %90 : vector<4x1xf32> to vector<4x256xf32>
    %115 = arith.addf %113, %114 : vector<4x256xf32>
    %116 = arith.negf %115 : vector<4x256xf32>
    %117 = math.exp %116 : vector<4x256xf32>
    %cst_5 = arith.constant 1.000000e+00 : f32
    %118 = vector.broadcast %cst_5 : f32 to vector<4x256xf32>
    %119 = arith.addf %118, %117 : vector<4x256xf32>
    %120 = arith.divf %118, %119 : vector<4x256xf32>
    %121 = arith.mulf %115, %120 : vector<4x256xf32>
    %122 = vector.extract_strided_slice %2 {offsets = [0, 18], sizes = [4, 3], strides = [1, 1]} : vector<4x40xf32> to vector<4x3xf32>
    %123 = vector.extract_strided_slice %2 {offsets = [0, 21], sizes = [4, 1], strides = [1, 1]} : vector<4x40xf32> to vector<4x1xf32>
    %cst_6 = arith.constant 0.000000e+00 : f32
    %124 = vector.broadcast %cst_6 : f32 to vector<4x16xf32>
    %125 = vector.extract_strided_slice %121 {offsets = [0, 0], sizes = [4, 240], strides = [1, 1]} : vector<4x256xf32> to vector<4x240xf32>
    %126 = tpu.concatenate %124, %125 in 1 : vector<4x16xf32>, vector<4x240xf32> -> vector<4x256xf32>
    %127 = vector.extract_strided_slice %121 {offsets = [0, 16], sizes = [4, 240], strides = [1, 1]} : vector<4x256xf32> to vector<4x240xf32>
    %128 = tpu.concatenate %127, %124 in 1 : vector<4x240xf32>, vector<4x16xf32> -> vector<4x256xf32>
    %129 = vector.extract_strided_slice %122 {offsets = [0, 0], sizes = [4, 1], strides = [1, 1]} : vector<4x3xf32> to vector<4x1xf32>
    %130 = vector.broadcast %129 : vector<4x1xf32> to vector<4x256xf32>
    %131 = arith.mulf %126, %130 : vector<4x256xf32>
    %132 = vector.extract_strided_slice %122 {offsets = [0, 1], sizes = [4, 1], strides = [1, 1]} : vector<4x3xf32> to vector<4x1xf32>
    %133 = vector.broadcast %132 : vector<4x1xf32> to vector<4x256xf32>
    %134 = arith.mulf %121, %133 : vector<4x256xf32>
    %135 = arith.addf %131, %134 : vector<4x256xf32>
    %136 = vector.extract_strided_slice %122 {offsets = [0, 2], sizes = [4, 1], strides = [1, 1]} : vector<4x3xf32> to vector<4x1xf32>
    %137 = vector.broadcast %136 : vector<4x1xf32> to vector<4x256xf32>
    %138 = arith.mulf %128, %137 : vector<4x256xf32>
    %139 = arith.addf %135, %138 : vector<4x256xf32>
    %140 = vector.broadcast %123 : vector<4x1xf32> to vector<4x256xf32>
    %141 = arith.addf %139, %140 : vector<4x256xf32>
    %142 = arith.negf %141 : vector<4x256xf32>
    %143 = math.exp %142 : vector<4x256xf32>
    %cst_7 = arith.constant 1.000000e+00 : f32
    %144 = vector.broadcast %cst_7 : f32 to vector<4x256xf32>
    %145 = arith.addf %144, %143 : vector<4x256xf32>
    %146 = arith.divf %144, %145 : vector<4x256xf32>
    %147 = arith.mulf %141, %146 : vector<4x256xf32>
    %148 = vector.extract_strided_slice %2 {offsets = [0, 22], sizes = [4, 4], strides = [1, 1]} : vector<4x40xf32> to vector<4x4xf32>
    %149 = vector.extract_strided_slice %2 {offsets = [0, 26], sizes = [4, 1], strides = [1, 1]} : vector<4x40xf32> to vector<4x1xf32>
    %150 = vector.extract_strided_slice %148 {offsets = [0, 0], sizes = [4, 1], strides = [1, 1]} : vector<4x4xf32> to vector<4x1xf32>
    %151 = vector.extract_strided_slice %147 {offsets = [0, 0], sizes = [1, 256], strides = [1, 1]} : vector<4x256xf32> to vector<1x256xf32>
    %152 = vector.broadcast %150 : vector<4x1xf32> to vector<4x256xf32>
    %153 = vector.broadcast %151 : vector<1x256xf32> to vector<4x256xf32>
    %154 = arith.mulf %152, %153 : vector<4x256xf32>
    %155 = vector.extract_strided_slice %148 {offsets = [0, 1], sizes = [4, 1], strides = [1, 1]} : vector<4x4xf32> to vector<4x1xf32>
    %156 = vector.extract_strided_slice %147 {offsets = [1, 0], sizes = [1, 256], strides = [1, 1]} : vector<4x256xf32> to vector<1x256xf32>
    %157 = vector.broadcast %155 : vector<4x1xf32> to vector<4x256xf32>
    %158 = vector.broadcast %156 : vector<1x256xf32> to vector<4x256xf32>
    %159 = arith.mulf %157, %158 : vector<4x256xf32>
    %160 = arith.addf %154, %159 : vector<4x256xf32>
    %161 = vector.extract_strided_slice %148 {offsets = [0, 2], sizes = [4, 1], strides = [1, 1]} : vector<4x4xf32> to vector<4x1xf32>
    %162 = vector.extract_strided_slice %147 {offsets = [2, 0], sizes = [1, 256], strides = [1, 1]} : vector<4x256xf32> to vector<1x256xf32>
    %163 = vector.broadcast %161 : vector<4x1xf32> to vector<4x256xf32>
    %164 = vector.broadcast %162 : vector<1x256xf32> to vector<4x256xf32>
    %165 = arith.mulf %163, %164 : vector<4x256xf32>
    %166 = arith.addf %160, %165 : vector<4x256xf32>
    %167 = vector.extract_strided_slice %148 {offsets = [0, 3], sizes = [4, 1], strides = [1, 1]} : vector<4x4xf32> to vector<4x1xf32>
    %168 = vector.extract_strided_slice %147 {offsets = [3, 0], sizes = [1, 256], strides = [1, 1]} : vector<4x256xf32> to vector<1x256xf32>
    %169 = vector.broadcast %167 : vector<4x1xf32> to vector<4x256xf32>
    %170 = vector.broadcast %168 : vector<1x256xf32> to vector<4x256xf32>
    %171 = arith.mulf %169, %170 : vector<4x256xf32>
    %172 = arith.addf %166, %171 : vector<4x256xf32>
    %173 = vector.broadcast %149 : vector<4x1xf32> to vector<4x256xf32>
    %174 = arith.addf %172, %173 : vector<4x256xf32>
    %175 = arith.negf %174 : vector<4x256xf32>
    %176 = math.exp %175 : vector<4x256xf32>
    %cst_8 = arith.constant 1.000000e+00 : f32
    %177 = vector.broadcast %cst_8 : f32 to vector<4x256xf32>
    %178 = arith.addf %177, %176 : vector<4x256xf32>
    %179 = arith.divf %177, %178 : vector<4x256xf32>
    %180 = arith.mulf %174, %179 : vector<4x256xf32>
    %181 = vector.extract_strided_slice %2 {offsets = [0, 27], sizes = [4, 12], strides = [1, 1]} : vector<4x40xf32> to vector<4x12xf32>
    %182 = vector.extract_strided_slice %2 {offsets = [0, 39], sizes = [4, 1], strides = [1, 1]} : vector<4x40xf32> to vector<4x1xf32>
    %cst_9 = arith.constant 0.000000e+00 : f32
    %183 = vector.broadcast %cst_9 : f32 to vector<4x16xf32>
    %184 = vector.extract_strided_slice %180 {offsets = [0, 0], sizes = [4, 240], strides = [1, 1]} : vector<4x256xf32> to vector<4x240xf32>
    %185 = tpu.concatenate %183, %184 in 1 : vector<4x16xf32>, vector<4x240xf32> -> vector<4x256xf32>
    %186 = vector.extract_strided_slice %180 {offsets = [0, 16], sizes = [4, 240], strides = [1, 1]} : vector<4x256xf32> to vector<4x240xf32>
    %187 = tpu.concatenate %186, %183 in 1 : vector<4x240xf32>, vector<4x16xf32> -> vector<4x256xf32>
    %188 = vector.extract_strided_slice %181 {offsets = [0, 0], sizes = [4, 1], strides = [1, 1]} : vector<4x12xf32> to vector<4x1xf32>
    %189 = vector.extract_strided_slice %185 {offsets = [0, 0], sizes = [1, 256], strides = [1, 1]} : vector<4x256xf32> to vector<1x256xf32>
    %190 = vector.broadcast %188 : vector<4x1xf32> to vector<4x256xf32>
    %191 = vector.broadcast %189 : vector<1x256xf32> to vector<4x256xf32>
    %192 = arith.mulf %190, %191 : vector<4x256xf32>
    %193 = vector.extract_strided_slice %181 {offsets = [0, 1], sizes = [4, 1], strides = [1, 1]} : vector<4x12xf32> to vector<4x1xf32>
    %194 = vector.extract_strided_slice %185 {offsets = [1, 0], sizes = [1, 256], strides = [1, 1]} : vector<4x256xf32> to vector<1x256xf32>
    %195 = vector.broadcast %193 : vector<4x1xf32> to vector<4x256xf32>
    %196 = vector.broadcast %194 : vector<1x256xf32> to vector<4x256xf32>
    %197 = arith.mulf %195, %196 : vector<4x256xf32>
    %198 = arith.addf %192, %197 : vector<4x256xf32>
    %199 = vector.extract_strided_slice %181 {offsets = [0, 2], sizes = [4, 1], strides = [1, 1]} : vector<4x12xf32> to vector<4x1xf32>
    %200 = vector.extract_strided_slice %185 {offsets = [2, 0], sizes = [1, 256], strides = [1, 1]} : vector<4x256xf32> to vector<1x256xf32>
    %201 = vector.broadcast %199 : vector<4x1xf32> to vector<4x256xf32>
    %202 = vector.broadcast %200 : vector<1x256xf32> to vector<4x256xf32>
    %203 = arith.mulf %201, %202 : vector<4x256xf32>
    %204 = arith.addf %198, %203 : vector<4x256xf32>
    %205 = vector.extract_strided_slice %181 {offsets = [0, 3], sizes = [4, 1], strides = [1, 1]} : vector<4x12xf32> to vector<4x1xf32>
    %206 = vector.extract_strided_slice %185 {offsets = [3, 0], sizes = [1, 256], strides = [1, 1]} : vector<4x256xf32> to vector<1x256xf32>
    %207 = vector.broadcast %205 : vector<4x1xf32> to vector<4x256xf32>
    %208 = vector.broadcast %206 : vector<1x256xf32> to vector<4x256xf32>
    %209 = arith.mulf %207, %208 : vector<4x256xf32>
    %210 = arith.addf %204, %209 : vector<4x256xf32>
    %211 = vector.extract_strided_slice %181 {offsets = [0, 4], sizes = [4, 1], strides = [1, 1]} : vector<4x12xf32> to vector<4x1xf32>
    %212 = vector.extract_strided_slice %180 {offsets = [0, 0], sizes = [1, 256], strides = [1, 1]} : vector<4x256xf32> to vector<1x256xf32>
    %213 = vector.broadcast %211 : vector<4x1xf32> to vector<4x256xf32>
    %214 = vector.broadcast %212 : vector<1x256xf32> to vector<4x256xf32>
    %215 = arith.mulf %213, %214 : vector<4x256xf32>
    %216 = arith.addf %210, %215 : vector<4x256xf32>
    %217 = vector.extract_strided_slice %181 {offsets = [0, 5], sizes = [4, 1], strides = [1, 1]} : vector<4x12xf32> to vector<4x1xf32>
    %218 = vector.extract_strided_slice %180 {offsets = [1, 0], sizes = [1, 256], strides = [1, 1]} : vector<4x256xf32> to vector<1x256xf32>
    %219 = vector.broadcast %217 : vector<4x1xf32> to vector<4x256xf32>
    %220 = vector.broadcast %218 : vector<1x256xf32> to vector<4x256xf32>
    %221 = arith.mulf %219, %220 : vector<4x256xf32>
    %222 = arith.addf %216, %221 : vector<4x256xf32>
    %223 = vector.extract_strided_slice %181 {offsets = [0, 6], sizes = [4, 1], strides = [1, 1]} : vector<4x12xf32> to vector<4x1xf32>
    %224 = vector.extract_strided_slice %180 {offsets = [2, 0], sizes = [1, 256], strides = [1, 1]} : vector<4x256xf32> to vector<1x256xf32>
    %225 = vector.broadcast %223 : vector<4x1xf32> to vector<4x256xf32>
    %226 = vector.broadcast %224 : vector<1x256xf32> to vector<4x256xf32>
    %227 = arith.mulf %225, %226 : vector<4x256xf32>
    %228 = arith.addf %222, %227 : vector<4x256xf32>
    %229 = vector.extract_strided_slice %181 {offsets = [0, 7], sizes = [4, 1], strides = [1, 1]} : vector<4x12xf32> to vector<4x1xf32>
    %230 = vector.extract_strided_slice %180 {offsets = [3, 0], sizes = [1, 256], strides = [1, 1]} : vector<4x256xf32> to vector<1x256xf32>
    %231 = vector.broadcast %229 : vector<4x1xf32> to vector<4x256xf32>
    %232 = vector.broadcast %230 : vector<1x256xf32> to vector<4x256xf32>
    %233 = arith.mulf %231, %232 : vector<4x256xf32>
    %234 = arith.addf %228, %233 : vector<4x256xf32>
    %235 = vector.extract_strided_slice %181 {offsets = [0, 8], sizes = [4, 1], strides = [1, 1]} : vector<4x12xf32> to vector<4x1xf32>
    %236 = vector.extract_strided_slice %187 {offsets = [0, 0], sizes = [1, 256], strides = [1, 1]} : vector<4x256xf32> to vector<1x256xf32>
    %237 = vector.broadcast %235 : vector<4x1xf32> to vector<4x256xf32>
    %238 = vector.broadcast %236 : vector<1x256xf32> to vector<4x256xf32>
    %239 = arith.mulf %237, %238 : vector<4x256xf32>
    %240 = arith.addf %234, %239 : vector<4x256xf32>
    %241 = vector.extract_strided_slice %181 {offsets = [0, 9], sizes = [4, 1], strides = [1, 1]} : vector<4x12xf32> to vector<4x1xf32>
    %242 = vector.extract_strided_slice %187 {offsets = [1, 0], sizes = [1, 256], strides = [1, 1]} : vector<4x256xf32> to vector<1x256xf32>
    %243 = vector.broadcast %241 : vector<4x1xf32> to vector<4x256xf32>
    %244 = vector.broadcast %242 : vector<1x256xf32> to vector<4x256xf32>
    %245 = arith.mulf %243, %244 : vector<4x256xf32>
    %246 = arith.addf %240, %245 : vector<4x256xf32>
    %247 = vector.extract_strided_slice %181 {offsets = [0, 10], sizes = [4, 1], strides = [1, 1]} : vector<4x12xf32> to vector<4x1xf32>
    %248 = vector.extract_strided_slice %187 {offsets = [2, 0], sizes = [1, 256], strides = [1, 1]} : vector<4x256xf32> to vector<1x256xf32>
    %249 = vector.broadcast %247 : vector<4x1xf32> to vector<4x256xf32>
    %250 = vector.broadcast %248 : vector<1x256xf32> to vector<4x256xf32>
    %251 = arith.mulf %249, %250 : vector<4x256xf32>
    %252 = arith.addf %246, %251 : vector<4x256xf32>
    %253 = vector.extract_strided_slice %181 {offsets = [0, 11], sizes = [4, 1], strides = [1, 1]} : vector<4x12xf32> to vector<4x1xf32>
    %254 = vector.extract_strided_slice %187 {offsets = [3, 0], sizes = [1, 256], strides = [1, 1]} : vector<4x256xf32> to vector<1x256xf32>
    %255 = vector.broadcast %253 : vector<4x1xf32> to vector<4x256xf32>
    %256 = vector.broadcast %254 : vector<1x256xf32> to vector<4x256xf32>
    %257 = arith.mulf %255, %256 : vector<4x256xf32>
    %258 = arith.addf %252, %257 : vector<4x256xf32>
    %259 = vector.broadcast %182 : vector<4x1xf32> to vector<4x256xf32>
    %260 = arith.addf %258, %259 : vector<4x256xf32>
    %261 = arith.negf %260 : vector<4x256xf32>
    %262 = math.exp %261 : vector<4x256xf32>
    %cst_10 = arith.constant 1.000000e+00 : f32
    %263 = vector.broadcast %cst_10 : f32 to vector<4x256xf32>
    %264 = arith.addf %263, %262 : vector<4x256xf32>
    %265 = arith.divf %263, %264 : vector<4x256xf32>
    %266 = arith.mulf %260, %265 : vector<4x256xf32>
    %267 = arith.addf %266, %1 : vector<4x256xf32>
    %c0_11 = arith.constant 0 : index
    %c0_12 = arith.constant 0 : index
    %c0_13 = arith.constant 0 : index
    %268 = vector.load %arg3[%c0_11, %c0_12, %c0_13] : memref<1x4x256xf32, #tpu.memory_space<vmem>>, vector<1x4x256xf32>
    %269 = vector.shape_cast %268 : vector<1x4x256xf32> to vector<4x256xf32>
    %270 = vector.shape_cast %267 : vector<4x256xf32> to vector<1x4x256xf32>
    tpu.vector_store %arg3[%c0_11, %c0_12, %c0_13], %270 {strides = array<i32>} : memref<1x4x256xf32, #tpu.memory_space<vmem>>, vector<1x4x256xf32>,
    return
  }
  func.func @transform_0(%arg0: i32) -> (i32, i32, i32) {
    %c0_i32 = arith.constant 0 : i32
    %c0_i32_0 = arith.constant 0 : i32
    %c0_i32_1 = arith.constant 0 : i32
    return %arg0, %c0_i32, %c0_i32_0 : i32, i32, i32
  }
  func.func @transform_1(%arg0: i32) -> (i32, i32) {
    %c0_i32 = arith.constant 0 : i32
    %c0_i32_0 = arith.constant 0 : i32
    %c0_i32_1 = arith.constant 0 : i32
    return %c0_i32, %c0_i32_0 : i32, i32
  }
  func.func @transform_2(%arg0: i32) -> (i32, i32, i32) {
    %c0_i32 = arith.constant 0 : i32
    %c0_i32_0 = arith.constant 0 : i32
    %c0_i32_1 = arith.constant 0 : i32
    return %arg0, %c0_i32, %c0_i32_0 : i32, i32, i32
  }
}

</mosaic_0001>

<llo_original>
// kernel: tpu_custom_call.1
$region0: #{tpu_custom_call.1}
  #allocation0 [shape = 'u32[]', space=smem, size = 0x4, offset = 0x4, fixed_abs, tag = 'smem constant byte address 0x4 - core index']
  #allocation1 [shape = 'u32[144,128]{1,0:T(1,128)}', space=vmem, size = 0x12000, scoped, tag = 'internal scratch']
  %s0 = inlined_call_operand.hbm [shape: f32[4,256], index: 0, kind: input, shape index: {}]
  %s1 = inlined_call_operand.hbm [shape: f32[4,256], index: 1, kind: output, shape index: {}]
  %s2 = sld [smem:[#allocation0]]
  $region18: #{tpu_custom_call.1} parent=0
    _
  %s4 = ssub.s32 1, %s2
  %s5 = scalar_select 0, %s4, %s2
  $region1: #{tpu_custom_call.1} parent=0
    #allocation2 [shape = 'u8[4096]{0}', space=vmem, size = 0x1000, scoped, tag = 'input window, operand 0, single buffered']
    #allocation3 [shape = 's32[1]{0}', space=sflag, size = 0x4, scoped, tag = 'scoped memory for tpu_custom_call.1']
    #allocation4 [shape = 's32[1]{0}', space=sflag, size = 0x4, scoped, tag = 'scoped memory for tpu_custom_call.1']
    #allocation5 [shape = 'u8[4096]{0}', space=vmem, size = 0x1000, scoped, tag = 'output window, operand 0, single buffered']
    %6 = vsyncpa [#allocation3], 0
    %7 = vsyncpa [#allocation4], 0
    // Predicated region
    $region2: #{tpu_custom_call.1} parent=1 // pred_check
      _
    $region3: #{tpu_custom_call.1} parent=1 // pred_check_branch
      %9 = sbr.rel (0) target = $region5
    $region4: #{tpu_custom_call.1} parent=1 // pred_region
      %s11 = ssub.s32 128, 128
      %12 = vsyncadd [#allocation3], %s11
      %s14 = sshll.u32 [#allocation2], 4
      %s15 = int_to_ptr.vmem [resolvable:$true] %s14
      %17 = dma.hbm_to_vmem [thread:$0]  %s0, 128, %s15, [#allocation3]
    $region5: #{tpu_custom_call.1} parent=1 // pred_fallthru
      _
    // Predicated region
    $region6: #{tpu_custom_call.1} parent=1 // pred_check
      _
    $region7: #{tpu_custom_call.1} parent=1 // pred_check_branch
      %19 = sbr.rel (0) target = $region9
    $region8: #{tpu_custom_call.1} parent=1 // pred_region
      %20 = dma.done [#allocation3], 128
    $region9: #{tpu_custom_call.1} parent=1 // pred_fallthru
      _
    %v21 = vld [vmem:[#allocation2] sm:$0xff]
    %v23 = vcombine.high %v21, %v21
    %25 = vrot.lane.b32.xlu0 %v21, 16
    %v26 = vpop.permute.xlu0 %25
    %27 = vrot.lane.b32.xlu0 %v23, 16
    %v28 = vpop.permute.xlu0 %27
    %v29 = vlaneseq
    %v30 = vand.u32 %v29, 127
    %vm31 = vcmp.lt.s32.totalorder %v30, 16
    %v32 = vsel %vm31, %v26, %v28
    %v33 = vsel %vm31, %v28, %v26
    %v36 = vcombine.low %v33, %v32
    %38 = vst [vmem:[#allocation5] sm:$0xff] %v36
    // Predicated region
    $region10: #{tpu_custom_call.1} parent=1 // pred_check
      _
    $region11: #{tpu_custom_call.1} parent=1 // pred_check_branch
      %40 = sbr.rel (0) target = $region13
    $region12: #{tpu_custom_call.1} parent=1 // pred_region
      %s42 = ssub.s32 128, 128
      %43 = vsyncadd [#allocation4], %s42
      %s45 = sshll.u32 [#allocation5], 4
      %s46 = int_to_ptr.vmem [resolvable:$true] %s45
      %48 = dma.vmem_to_hbm [thread:$0]  %s46, 128, %s1, [#allocation4]
    $region13: #{tpu_custom_call.1} parent=1 // pred_fallthru
      _
    // Predicated region
    $region14: #{tpu_custom_call.1} parent=1 // pred_check
      _
    $region15: #{tpu_custom_call.1} parent=1 // pred_check_branch
      %50 = sbr.rel (0) target = $region17
    $region16: #{tpu_custom_call.1} parent=1 // pred_region
      %51 = dma.done [#allocation4], 128
    $region17: #{tpu_custom_call.1} parent=1 // pred_fallthru
      _
    %52 = vsyncpa [#allocation3], 1
    %53 = vsyncpa [#allocation4], 1

// kernel: tpu_custom_call.1
$region0: #{tpu_custom_call.1}
  #allocation0 [shape = 'u32[]', space=smem, size = 0x4, offset = 0x4, fixed_abs, tag = 'smem constant byte address 0x4 - core index']
  #allocation1 [shape = 'u32[144,128]{1,0:T(1,128)}', space=vmem, size = 0x12000, scoped, tag = 'internal scratch']
  %s0 = inlined_call_operand.hbm [shape: f32[2,4,256], index: 0, kind: input, shape index: {}]
  %s1 = inlined_call_operand.hbm [shape: f32[4,40], index: 1, kind: input, shape index: {}]
  %s2 = inlined_call_operand.hbm [shape: f32[2,4,256], index: 2, kind: output, shape index: {}]
  %s3 = sld [smem:[#allocation0]]
  $region49: #{tpu_custom_call.1} parent=0
    _
  %s5 = ssub.s32 1, %s3
  %s6 = scalar_select 0, %s5, %s3
  $region1: #{tpu_custom_call.1} parent=0
    #allocation2 [shape = 'u8[8192]{0}', space=vmem, size = 0x2000, scoped, tag = 'input window, operand 0']
    #allocation3 [shape = 's32[2]{0}', space=sflag, size = 0x8, scoped, tag = 'scoped memory for tpu_custom_call.1']
    #allocation4 [shape = 's32[2]{0}', space=sflag, size = 0x8, scoped, tag = 'scoped memory for tpu_custom_call.1']
    #allocation5 [shape = 'u8[2048]{0}', space=vmem, size = 0x800, scoped, tag = 'input window, operand 1, single buffered']
    #allocation6 [shape = 's32[1]{0}', space=sflag, size = 0x4, scoped, tag = 'scoped memory for tpu_custom_call.1']
    #allocation7 [shape = 'u8[8192]{0}', space=vmem, size = 0x2000, scoped, tag = 'output window, operand 0']
    %7 = vsyncpa [#allocation3], 0
    %s8 = scalar_lea.sflag [#allocation3], 1
    %9 = vsyncpa %s8, 0
    %10 = vsyncpa [#allocation6], 0
    %11 = vsyncpa [#allocation4], 0
    %s12 = scalar_lea.sflag [#allocation4], 1
    %13 = vsyncpa %s12, 0
    loop: start=0, step=1, limit=4
    $region2: #{tpu_custom_call.1} parent=1 // loop_pre_header
      _
    $region3: #{tpu_custom_call.1} parent=1 // loop_header
      %s15 = sphi 0, %s19
      %p16 = scmp.ge.s32.totalorder %s15, 4
      %s25 = sphi 0, %s27
      %s28 = sphi 0, %s25
      %s29 = sphi 0, %s28
      %s45 = sphi 0, %s29
      %s49 = sphi 0, %s49
      %s51 = sphi 0, %s49
      %s52 = sphi 0, %s51
      %s66 = sphi 0, %s52
      %s72 = sphi 0, %s74
      %s75 = sphi 0, %s72
      %s76 = sphi 0, %s75
      %s92 = sphi 0, %s76
    $region4: #{tpu_custom_call.1} parent=1 // loop_header_branch
      %18 = sbr.rel (%p16) target = $region8
    $region5: #{tpu_custom_call.1} parent=1 // loop_body
      %s20 = ssub.s32 %s15, 1
      %s21 = ssub.s32 %s15, 2
      %s22 = sadd.s32 %s15, 1
      %s23 = ssub.s32 %s15, %s22
      %p24 = scmp.eq.s32.totalorder %s23, 0
      %s26 = sadd.s32 %s25, 1
      %s27 = scalar_select %p24, %s25, %s26
      %p30 = pneg %p24
      %p31 = scmp.eq.s32.totalorder %s15, 1
      %p32 = por %p30, %p31
      %p33 = scmp.ne.s32.totalorder %s25, %s28
      %p34 = scmp.eq.s32.totalorder %s15, 0
      %p35 = por %p33, %p34
      %p36 = scmp.ne.s32.totalorder %s25, %s28
      %p37 = scmp.eq.s32.totalorder %s20, 1
      %p38 = por %p36, %p37
      %p39 = scmp.ne.s32.totalorder %s28, %s29
      %p40 = scmp.eq.s32.totalorder %s20, 0
      %p41 = por %p39, %p40
      %p42 = scmp.ne.s32.totalorder %s28, %s29
      %p43 = scmp.eq.s32.totalorder %s21, 1
      %p44 = por %p42, %p43
      %p46 = scmp.ne.s32.totalorder %s29, %s45
      %p47 = scmp.eq.s32.totalorder %s21, 0
      %p48 = por %p46, %p47
      %s50 = sadd.s32 %s49, 1
      %p53 = scmp.eq.s32.totalorder %s15, 1
      %p54 = scmp.ne.s32.totalorder %s49, %s51
      %p55 = scmp.eq.s32.totalorder %s15, 0
      %p56 = por %p54, %p55
      %p57 = scmp.ne.s32.totalorder %s49, %s51
      %p58 = scmp.eq.s32.totalorder %s20, 1
      %p59 = por %p57, %p58
      %p60 = scmp.ne.s32.totalorder %s51, %s52
      %p61 = scmp.eq.s32.totalorder %s20, 0
      %p62 = por %p60, %p61
      %p63 = scmp.ne.s32.totalorder %s51, %s52
      %p64 = scmp.eq.s32.totalorder %s21, 1
      %p65 = por %p63, %p64
      %p67 = scmp.ne.s32.totalorder %s52, %s66
      %p68 = scmp.eq.s32.totalorder %s21, 0
      %p69 = por %p67, %p68
      %s70 = ssub.s32 %s15, %s22
      %p71 = scmp.eq.s32.totalorder %s70, 0
      %s73 = sadd.s32 %s72, 1
      %s74 = scalar_select %p71, %s72, %s73
      %p77 = pneg %p71
      %p78 = scmp.eq.s32.totalorder %s15, 1
      %p79 = por %p77, %p78
      %p80 = scmp.ne.s32.totalorder %s72, %s75
      %p81 = scmp.eq.s32.totalorder %s15, 0
      %p82 = por %p80, %p81
      %p83 = scmp.ne.s32.totalorder %s72, %s75
      %p84 = scmp.eq.s32.totalorder %s20, 1
      %p85 = por %p83, %p84
      %p86 = scmp.ne.s32.totalorder %s75, %s76
      %p87 = scmp.eq.s32.totalorder %s20, 0
      %p88 = por %p86, %p87
      %p89 = scmp.ne.s32.totalorder %s75, %s76
      %p90 = scmp.eq.s32.totalorder %s21, 1
      %p91 = por %p89, %p90
      %p93 = scmp.ne.s32.totalorder %s76, %s92
      %p94 = scmp.eq.s32.totalorder %s21, 0
      %p95 = por %p93, %p94
      %p96 = scmp.le.s32.totalorder 1, %s15
      %p97 = scmp.lt.s32.totalorder %s15, 3
      %p98 = pnand %p96, %p97
      %p99 = pneg %p98
      // Predicated region
      $region9: #{tpu_custom_call.1} parent=5 // pred_check
        _
      $region10: #{tpu_custom_call.1} parent=5 // pred_check_branch
        %101 = sbr.rel (%p98) target = $region12
      $region11: #{tpu_custom_call.1} parent=5 // pred_region
        %s102 = ssub.s32 %s15, 1
        // Predicated region
        $region13: #{tpu_custom_call.1} parent=11 // pred_check
          %p103 = pneg %p62
        $region14: #{tpu_custom_call.1} parent=11 // pred_check_branch
          %105 = sbr.rel (%p103) target = $region16
        $region15: #{tpu_custom_call.1} parent=11 // pred_region
          %s107 = ssub.s32 64, 64
          %108 = vsyncadd [#allocation6], %s107
          %s110 = sshll.u32 [#allocation5], 4
          %s111 = int_to_ptr.vmem [resolvable:$true] %s110
          %113 = dma.hbm_to_vmem [thread:$0]  %s1, 64, %s111, [#allocation6]
        $region16: #{tpu_custom_call.1} parent=11 // pred_fallthru
          _
      $region12: #{tpu_custom_call.1} parent=5 // pred_fallthru
        _
      %p114 = scmp.lt.s32.totalorder %s15, 2
      // Predicated region
      $region17: #{tpu_custom_call.1} parent=5 // pred_check
        %p115 = pneg %p114
      $region18: #{tpu_custom_call.1} parent=5 // pred_check_branch
        %117 = sbr.rel (%p115) target = $region20
      $region19: #{tpu_custom_call.1} parent=5 // pred_region
        // Predicated region
        $region21: #{tpu_custom_call.1} parent=19 // pred_check
          %p118 = pneg %p35
        $region22: #{tpu_custom_call.1} parent=19 // pred_check_branch
          %120 = sbr.rel (%p118) target = $region24
        $region23: #{tpu_custom_call.1} parent=19 // pred_region
          %s121 = sand.u32 %s25, 1
          %s122 = scalar_lea.sflag [#allocation3], %s121
          %s123 = sand.u32 %s25, 1
          %s124 = smul.addr %s123, 8
          %s125 = scalar_lea.vmem [#allocation2], %s124
          %s127 = ssub.s32 128, 128
          %128 = vsyncadd %s122, %s127
          %s129 = smul.addr %s15, 2
          %s130 = smul.addr %s129, 64
          %s131 = scalar_lea.hbm %s0, %s130
          %s133 = sshll.u32 %s125, 4
          %s134 = int_to_ptr.vmem [resolvable:$true] %s133
          %136 = dma.hbm_to_vmem [thread:$0]  %s131, 128, %s134, %s122
        $region24: #{tpu_custom_call.1} parent=19 // pred_fallthru
          _
      $region20: #{tpu_custom_call.1} parent=5 // pred_fallthru
        _
      %p137 = scmp.le.s32.totalorder 1, %s15
      %p138 = scmp.lt.s32.totalorder %s15, 3
      %p139 = pnand %p137, %p138
      %p140 = pneg %p139
      // Predicated region
      $region25: #{tpu_custom_call.1} parent=5 // pred_check
        _
      $region26: #{tpu_custom_call.1} parent=5 // pred_check_branch
        %142 = sbr.rel (%p139) target = $region28
      $region27: #{tpu_custom_call.1} parent=5 // pred_region
        %s143 = ssub.s32 %s15, 1
        %s144 = sand.u32 %s28, 1
        %s145 = scalar_lea.sflag [#allocation3], %s144
        %s146 = sand.u32 %s28, 1
        %s147 = smul.addr %s146, 8
        %s148 = scalar_lea.vmem [#allocation2], %s147
        // Predicated region
        $region29: #{tpu_custom_call.1} parent=27 // pred_check
          %p149 = pneg %p41
        $region30: #{tpu_custom_call.1} parent=27 // pred_check_branch
          %151 = sbr.rel (%p149) target = $region32
        $region31: #{tpu_custom_call.1} parent=27 // pred_region
          %152 = dma.done %s145, 128
        $region32: #{tpu_custom_call.1} parent=27 // pred_fallthru
          _
        // Predicated region
        $region33: #{tpu_custom_call.1} parent=27 // pred_check
          %p153 = pneg %p62
        $region34: #{tpu_custom_call.1} parent=27 // pred_check_branch
          %155 = sbr.rel (%p153) target = $region36
        $region35: #{tpu_custom_call.1} parent=27 // pred_region
          %156 = dma.done [#allocation6], 64
        $region36: #{tpu_custom_call.1} parent=27 // pred_fallthru
          _
        %s157 = sand.u32 %s28, 1
        %s158 = scalar_lea.sflag [#allocation3], %s157
        %s159 = sand.u32 %s28, 1
        %s160 = smul.addr %s159, 8
        %s161 = scalar_lea.vmem [#allocation2], %s160
        %p162 = pneg %p41
        %p163 = pneg %p38
        %p164 = pneg %p62
        %p165 = pneg %p59
        %p166 = pneg %p88
        %p167 = pneg %p85
        %s168 = sand.u32 %s75, 1
        %s169 = scalar_lea.sflag [#allocation4], %s168
        %s170 = sand.u32 %s75, 1
        %s171 = smul.addr %s170, 8
        %s172 = scalar_lea.vmem [#allocation7], %s171
        %v173 = vld [vmem:[%s148] sm:$0xff]
        %v174 = vld [vmem:[#allocation5] sm:$0xf]
        %v176 = vcombine.high %v173, %v173
        %177 = vrot.lane.b32.xlu0 %v173, 16
        %v178 = vpop.permute.xlu0 %177
        %179 = vrot.lane.b32.xlu0 %v176, 16
        %v180 = vpop.permute.xlu0 %179
        %vm181 = vcmask 130048
        %v182 = vsel %vm181, %v178, %v180
        %v185 = vsel %vm181, 0.0, %v178
        %186 = vrot.lane.b32.xlu0 %v173, 112
        %v187 = vpop.permute.xlu0 %186
        %188 = vrot.lane.b32.xlu0 %v176, 112
        %v189 = vpop.permute.xlu0 %188
        %vm190 = vcmask 916480
        %v191 = vsel %vm190, %v187, %v189
        %v194 = vsel %vm190, %v189, 0.0
        %196 = vset.pattern.permute.xlu0 0
        %197 = vperm.xlu0 %196, %v174
        %v198 = vpop.permute.xlu0 %197
        %v200 = vlaneseq
        %v201 = vshrl.u32 %v200, 7
        %v202 = vsub.s32 0, %v201
        %v203 = vrot.slane %v185, %v202
        %v204 = vlaneseq
        %v205 = vshrl.u32 %v204, 7
        %v206 = vsub.s32 0, %v205
        %v207 = vrot.slane %v182, %v206
        %v208 = vmul.f32 %v198, %v203
        %v209 = vmul.f32 %v198, %v207
        %210 = vset.pattern.permute.xlu0 1
        %211 = vperm.xlu0 %210, %v174
        %v212 = vpop.permute.xlu0 %211
        %v214 = vlaneseq
        %v215 = vshrl.u32 %v214, 7
        %v216 = vsub.s32 1, %v215
        %v217 = vrot.slane %v185, %v216
        %v218 = vlaneseq
        %v219 = vshrl.u32 %v218, 7
        %v220 = vsub.s32 1, %v219
        %v221 = vrot.slane %v182, %v220
        %v222 = vmul.f32 %v212, %v217
        %v223 = vmul.f32 %v212, %v221
        %v224 = vadd.f32 %v208, %v222
        %v225 = vadd.f32 %v209, %v223
        %226 = vset.pattern.permute.xlu0 2
        %227 = vperm.xlu0 %226, %v174
        %v228 = vpop.permute.xlu0 %227
        %v230 = vlaneseq
        %v231 = vshrl.u32 %v230, 7
        %v232 = vsub.s32 2, %v231
        %v233 = vrot.slane %v185, %v232
        %v234 = vlaneseq
        %v235 = vshrl.u32 %v234, 7
        %v236 = vsub.s32 2, %v235
        %v237 = vrot.slane %v182, %v236
        %v238 = vmul.f32 %v228, %v233
        %v239 = vmul.f32 %v228, %v237
        %v240 = vadd.f32 %v224, %v238
        %v241 = vadd.f32 %v225, %v239
        %242 = vset.pattern.permute.xlu0 3
        %243 = vperm.xlu0 %242, %v174
        %v244 = vpop.permute.xlu0 %243
        %v246 = vlaneseq
        %v247 = vshrl.u32 %v246, 7
        %v248 = vsub.s32 3, %v247
        %v249 = vrot.slane %v185, %v248
        %v250 = vlaneseq
        %v251 = vshrl.u32 %v250, 7
        %v252 = vsub.s32 3, %v251
        %v253 = vrot.slane %v182, %v252
        %v254 = vmul.f32 %v244, %v249
        %v255 = vmul.f32 %v244, %v253
        %v256 = vadd.f32 %v240, %v254
        %v257 = vadd.f32 %v241, %v255
        %258 = vset.pattern.permute.xlu0 4
        %259 = vperm.xlu0 %258, %v174
        %v260 = vpop.permute.xlu0 %259
        %v262 = vlaneseq
        %v263 = vshrl.u32 %v262, 7
        %v264 = vsub.s32 0, %v263
        %v265 = vrot.slane %v173, %v264
        %v266 = vlaneseq
        %v267 = vshrl.u32 %v266, 7
        %v268 = vsub.s32 4, %v267
        %v269 = vrot.slane %v173, %v268
        %v272 = vlaneseq
        %v273 = vshrl.u32 %v272, 7
        %v274 = vsub.s32 0, %v273
        %v275 = vrot.slane %v265, %v274
        %v276 = vlaneseq
        %v277 = vshrl.u32 %v276, 7
        %v278 = vsub.s32 0, %v277
        %v279 = vrot.slane %v269, %v278
        %v280 = vmul.f32 %v260, %v275
        %v281 = vmul.f32 %v260, %v279
        %v282 = vadd.f32 %v256, %v280
        %v283 = vadd.f32 %v257, %v281
        %284 = vset.pattern.permute.xlu0 5
        %285 = vperm.xlu0 %284, %v174
        %v286 = vpop.permute.xlu0 %285
        %v288 = vlaneseq
        %v289 = vshrl.u32 %v288, 7
        %v290 = vsub.s32 1, %v289
        %v291 = vrot.slane %v173, %v290
        %v292 = vlaneseq
        %v293 = vshrl.u32 %v292, 7
        %v294 = vsub.s32 5, %v293
        %v295 = vrot.slane %v173, %v294
        %v298 = vlaneseq
        %v299 = vshrl.u32 %v298, 7
        %v300 = vsub.s32 1, %v299
        %v301 = vrot.slane %v291, %v300
        %v302 = vlaneseq
        %v303 = vshrl.u32 %v302, 7
        %v304 = vsub.s32 1, %v303
        %v305 = vrot.slane %v295, %v304
        %v306 = vmul.f32 %v286, %v301
        %v307 = vmul.f32 %v286, %v305
        %v308 = vadd.f32 %v282, %v306
        %v309 = vadd.f32 %v283, %v307
        %310 = vset.pattern.permute.xlu0 6
        %311 = vperm.xlu0 %310, %v174
        %v312 = vpop.permute.xlu0 %311
        %v314 = vlaneseq
        %v315 = vshrl.u32 %v314, 7
        %v316 = vsub.s32 2, %v315
        %v317 = vrot.slane %v173, %v316
        %v318 = vlaneseq
        %v319 = vshrl.u32 %v318, 7
        %v320 = vsub.s32 6, %v319
        %v321 = vrot.slane %v173, %v320
        %v324 = vlaneseq
        %v325 = vshrl.u32 %v324, 7
        %v326 = vsub.s32 2, %v325
        %v327 = vrot.slane %v317, %v326
        %v328 = vlaneseq
        %v329 = vshrl.u32 %v328, 7
        %v330 = vsub.s32 2, %v329
        %v331 = vrot.slane %v321, %v330
        %v332 = vmul.f32 %v312, %v327
        %v333 = vmul.f32 %v312, %v331
        %v334 = vadd.f32 %v308, %v332
        %v335 = vadd.f32 %v309, %v333
        %336 = vset.pattern.permute.xlu0 7
        %337 = vperm.xlu0 %336, %v174
        %v338 = vpop.permute.xlu0 %337
        %v340 = vlaneseq
        %v341 = vshrl.u32 %v340, 7
        %v342 = vsub.s32 3, %v341
        %v343 = vrot.slane %v173, %v342
        %v344 = vlaneseq
        %v345 = vshrl.u32 %v344, 7
        %v346 = vsub.s32 7, %v345
        %v347 = vrot.slane %v173, %v346
        %v350 = vlaneseq
        %v351 = vshrl.u32 %v350, 7
        %v352 = vsub.s32 3, %v351
        %v353 = vrot.slane %v343, %v352
        %v354 = vlaneseq
        %v355 = vshrl.u32 %v354, 7
        %v356 = vsub.s32 3, %v355
        %v357 = vrot.slane %v347, %v356
        %v358 = vmul.f32 %v338, %v353
        %v359 = vmul.f32 %v338, %v357
        %v360 = vadd.f32 %v334, %v358
        %v361 = vadd.f32 %v335, %v359
        %362 = vset.pattern.permute.xlu0 8
        %363 = vperm.xlu0 %362, %v174
        %v364 = vpop.permute.xlu0 %363
        %v366 = vlaneseq
        %v367 = vshrl.u32 %v366, 7
        %v368 = vsub.s32 0, %v367
        %v369 = vrot.slane %v191, %v368
        %v370 = vlaneseq
        %v371 = vshrl.u32 %v370, 7
        %v372 = vsub.s32 0, %v371
        %v373 = vrot.slane %v194, %v372
        %v374 = vmul.f32 %v364, %v369
        %v375 = vmul.f32 %v364, %v373
        %v376 = vadd.f32 %v360, %v374
        %v377 = vadd.f32 %v361, %v375
        %378 = vset.pattern.permute.xlu0 9
        %379 = vperm.xlu0 %378, %v174
        %v380 = vpop.permute.xlu0 %379
        %v382 = vlaneseq
        %v383 = vshrl.u32 %v382, 7
        %v384 = vsub.s32 1, %v383
        %v385 = vrot.slane %v191, %v384
        %v386 = vlaneseq
        %v387 = vshrl.u32 %v386, 7
        %v388 = vsub.s32 1, %v387
        %v389 = vrot.slane %v194, %v388
        %v390 = vmul.f32 %v380, %v385
        %v391 = vmul.f32 %v380, %v389
        %v392 = vadd.f32 %v376, %v390
        %v393 = vadd.f32 %v377, %v391
        %394 = vset.pattern.permute.xlu0 10
        %395 = vperm.xlu0 %394, %v174
        %v396 = vpop.permute.xlu0 %395
        %v398 = vlaneseq
        %v399 = vshrl.u32 %v398, 7
        %v400 = vsub.s32 2, %v399
        %v401 = vrot.slane %v191, %v400
        %v402 = vlaneseq
        %v403 = vshrl.u32 %v402, 7
        %v404 = vsub.s32 2, %v403
        %v405 = vrot.slane %v194, %v404
        %v406 = vmul.f32 %v396, %v401
        %v407 = vmul.f32 %v396, %v405
        %v408 = vadd.f32 %v392, %v406
        %v409 = vadd.f32 %v393, %v407
        %410 = vset.pattern.permute.xlu0 11
        %411 = vperm.xlu0 %410, %v174
        %v412 = vpop.permute.xlu0 %411
        %v414 = vlaneseq
        %v415 = vshrl.u32 %v414, 7
        %v416 = vsub.s32 3, %v415
        %v417 = vrot.slane %v191, %v416
        %v418 = vlaneseq
        %v419 = vshrl.u32 %v418, 7
        %v420 = vsub.s32 3, %v419
        %v421 = vrot.slane %v194, %v420
        %v422 = vmul.f32 %v412, %v417
        %v423 = vmul.f32 %v412, %v421
        %v424 = vadd.f32 %v408, %v422
        %v425 = vadd.f32 %v409, %v423
        %426 = vset.pattern.permute.xlu0 12
        %427 = vperm.xlu0 %426, %v174
        %v428 = vpop.permute.xlu0 %427
        %v430 = vadd.f32 %v424, %v428
        %v431 = vadd.f32 %v425, %v428
        %v432 = vxor.u32 %v430, 2147483648
        %v433 = vxor.u32 %v431, 2147483648
        %v434 = vmul.f32 %v432, 1.442695
        %v435 = vpow.pop %v434
        %v436 = vmul.f32 %v433, 1.442695
        %v437 = vpow.pop %v436
        %v438 = vadd.f32 %v435, 1.0
        %v439 = vadd.f32 %v437, 1.0
        %v440 = vrcp.pop %v438
        %v441 = vmul.f32 1.0, %v440
        %v442 = vrcp.pop %v439
        %v443 = vmul.f32 1.0, %v442
        %v444 = vmul.f32 %v430, %v441
        %v445 = vmul.f32 %v431, %v443
        %446 = vset.pattern.permute.xlu0 13
        %447 = vperm.xlu0 %446, %v174
        %v448 = vpop.permute.xlu0 %447
        %v450 = vlaneseq
        %v451 = vshrl.u32 %v450, 7
        %v452 = vsub.s32 0, %v451
        %v453 = vrot.slane %v444, %v452
        %v454 = vlaneseq
        %v455 = vshrl.u32 %v454, 7
        %v456 = vsub.s32 0, %v455
        %v457 = vrot.slane %v445, %v456
        %v458 = vmul.f32 %v448, %v453
        %v459 = vmul.f32 %v448, %v457
        %460 = vset.pattern.permute.xlu0 14
        %461 = vperm.xlu0 %460, %v174
        %v462 = vpop.permute.xlu0 %461
        %v464 = vlaneseq
        %v465 = vshrl.u32 %v464, 7
        %v466 = vsub.s32 1, %v465
        %v467 = vrot.slane %v444, %v466
        %v468 = vlaneseq
        %v469 = vshrl.u32 %v468, 7
        %v470 = vsub.s32 1, %v469
        %v471 = vrot.slane %v445, %v470
        %v472 = vmul.f32 %v462, %v467
        %v473 = vmul.f32 %v462, %v471
        %v474 = vadd.f32 %v458, %v472
        %v475 = vadd.f32 %v459, %v473
        %476 = vset.pattern.permute.xlu0 15
        %477 = vperm.xlu0 %476, %v174
        %v478 = vpop.permute.xlu0 %477
        %v480 = vlaneseq
        %v481 = vshrl.u32 %v480, 7
        %v482 = vsub.s32 2, %v481
        %v483 = vrot.slane %v444, %v482
        %v484 = vlaneseq
        %v485 = vshrl.u32 %v484, 7
        %v486 = vsub.s32 2, %v485
        %v487 = vrot.slane %v445, %v486
        %v488 = vmul.f32 %v478, %v483
        %v489 = vmul.f32 %v478, %v487
        %v490 = vadd.f32 %v474, %v488
        %v491 = vadd.f32 %v475, %v489
        %492 = vset.pattern.permute.xlu0 16
        %493 = vperm.xlu0 %492, %v174
        %v494 = vpop.permute.xlu0 %493
        %v496 = vlaneseq
        %v497 = vshrl.u32 %v496, 7
        %v498 = vsub.s32 3, %v497
        %v499 = vrot.slane %v444, %v498
        %v500 = vlaneseq
        %v501 = vshrl.u32 %v500, 7
        %v502 = vsub.s32 3, %v501
        %v503 = vrot.slane %v445, %v502
        %v504 = vmul.f32 %v494, %v499
        %v505 = vmul.f32 %v494, %v503
        %v506 = vadd.f32 %v490, %v504
        %v507 = vadd.f32 %v491, %v505
        %508 = vset.pattern.permute.xlu0 17
        %509 = vperm.xlu0 %508, %v174
        %v510 = vpop.permute.xlu0 %509
        %v512 = vadd.f32 %v506, %v510
        %v513 = vadd.f32 %v507, %v510
        %v514 = vxor.u32 %v512, 2147483648
        %v515 = vxor.u32 %v513, 2147483648
        %v516 = vmul.f32 %v514, 1.442695
        %v517 = vpow.pop %v516
        %v518 = vmul.f32 %v515, 1.442695
        %v519 = vpow.pop %v518
        %v520 = vadd.f32 %v517, 1.0
        %v521 = vadd.f32 %v519, 1.0
        %v522 = vrcp.pop %v520
        %v523 = vmul.f32 1.0, %v522
        %v524 = vrcp.pop %v521
        %v525 = vmul.f32 1.0, %v524
        %v526 = vmul.f32 %v512, %v523
        %v527 = vmul.f32 %v513, %v525
        %530 = vrot.lane.b32.xlu0 %v526, 16
        %v531 = vpop.permute.xlu0 %530
        %532 = vrot.lane.b32.xlu0 %v527, 16
        %v533 = vpop.permute.xlu0 %532
        %v534 = vsel %vm181, %v531, %v533
        %v537 = vsel %vm181, 0.0, %v531
        %538 = vrot.lane.b32.xlu0 %v526, 112
        %v539 = vpop.permute.xlu0 %538
        %540 = vrot.lane.b32.xlu0 %v527, 112
        %v541 = vpop.permute.xlu0 %540
        %v542 = vsel %vm190, %v539, %v541
        %v545 = vsel %vm190, %v541, 0.0
        %546 = vset.pattern.permute.xlu0 18
        %547 = vperm.xlu0 %546, %v174
        %v548 = vpop.permute.xlu0 %547
        %v550 = vmul.f32 %v537, %v548
        %v551 = vmul.f32 %v534, %v548
        %552 = vset.pattern.permute.xlu0 19
        %553 = vperm.xlu0 %552, %v174
        %v554 = vpop.permute.xlu0 %553
        %v556 = vmul.f32 %v526, %v554
        %v557 = vmul.f32 %v527, %v554
        %v558 = vadd.f32 %v550, %v556
        %v559 = vadd.f32 %v551, %v557
        %560 = vset.pattern.permute.xlu0 20
        %561 = vperm.xlu0 %560, %v174
        %v562 = vpop.permute.xlu0 %561
        %v564 = vmul.f32 %v542, %v562
        %v565 = vmul.f32 %v545, %v562
        %v566 = vadd.f32 %v558, %v564
        %v567 = vadd.f32 %v559, %v565
        %568 = vset.pattern.permute.xlu0 21
        %569 = vperm.xlu0 %568, %v174
        %v570 = vpop.permute.xlu0 %569
        %v572 = vadd.f32 %v566, %v570
        %v573 = vadd.f32 %v567, %v570
        %v574 = vxor.u32 %v572, 2147483648
        %v575 = vxor.u32 %v573, 2147483648
        %v576 = vmul.f32 %v574, 1.442695
        %v577 = vpow.pop %v576
        %v578 = vmul.f32 %v575, 1.442695
        %v579 = vpow.pop %v578
        %v580 = vadd.f32 %v577, 1.0
        %v581 = vadd.f32 %v579, 1.0
        %v582 = vrcp.pop %v580
        %v583 = vmul.f32 1.0, %v582
        %v584 = vrcp.pop %v581
        %v585 = vmul.f32 1.0, %v584
        %v586 = vmul.f32 %v572, %v583
        %v587 = vmul.f32 %v573, %v585
        %588 = vset.pattern.permute.xlu0 22
        %589 = vperm.xlu0 %588, %v174
        %v590 = vpop.permute.xlu0 %589
        %v592 = vlaneseq
        %v593 = vshrl.u32 %v592, 7
        %v594 = vsub.s32 0, %v593
        %v595 = vrot.slane %v586, %v594
        %v596 = vlaneseq
        %v597 = vshrl.u32 %v596, 7
        %v598 = vsub.s32 0, %v597
        %v599 = vrot.slane %v587, %v598
        %v600 = vmul.f32 %v590, %v595
        %v601 = vmul.f32 %v590, %v599
        %602 = vset.pattern.permute.xlu0 23
        %603 = vperm.xlu0 %602, %v174
        %v604 = vpop.permute.xlu0 %603
        %v606 = vlaneseq
        %v607 = vshrl.u32 %v606, 7
        %v608 = vsub.s32 1, %v607
        %v609 = vrot.slane %v586, %v608
        %v610 = vlaneseq
        %v611 = vshrl.u32 %v610, 7
        %v612 = vsub.s32 1, %v611
        %v613 = vrot.slane %v587, %v612
        %v614 = vmul.f32 %v604, %v609
        %v615 = vmul.f32 %v604, %v613
        %v616 = vadd.f32 %v600, %v614
        %v617 = vadd.f32 %v601, %v615
        %618 = vset.pattern.permute.xlu0 24
        %619 = vperm.xlu0 %618, %v174
        %v620 = vpop.permute.xlu0 %619
        %v622 = vlaneseq
        %v623 = vshrl.u32 %v622, 7
        %v624 = vsub.s32 2, %v623
        %v625 = vrot.slane %v586, %v624
        %v626 = vlaneseq
        %v627 = vshrl.u32 %v626, 7
        %v628 = vsub.s32 2, %v627
        %v629 = vrot.slane %v587, %v628
        %v630 = vmul.f32 %v620, %v625
        %v631 = vmul.f32 %v620, %v629
        %v632 = vadd.f32 %v616, %v630
        %v633 = vadd.f32 %v617, %v631
        %634 = vset.pattern.permute.xlu0 25
        %635 = vperm.xlu0 %634, %v174
        %v636 = vpop.permute.xlu0 %635
        %v638 = vlaneseq
        %v639 = vshrl.u32 %v638, 7
        %v640 = vsub.s32 3, %v639
        %v641 = vrot.slane %v586, %v640
        %v642 = vlaneseq
        %v643 = vshrl.u32 %v642, 7
        %v644 = vsub.s32 3, %v643
        %v645 = vrot.slane %v587, %v644
        %v646 = vmul.f32 %v636, %v641
        %v647 = vmul.f32 %v636, %v645
        %v648 = vadd.f32 %v632, %v646
        %v649 = vadd.f32 %v633, %v647
        %650 = vset.pattern.permute.xlu0 26
        %651 = vperm.xlu0 %650, %v174
        %v652 = vpop.permute.xlu0 %651
        %v654 = vadd.f32 %v648, %v652
        %v655 = vadd.f32 %v649, %v652
        %v656 = vxor.u32 %v654, 2147483648
        %v657 = vxor.u32 %v655, 2147483648
        %v658 = vmul.f32 %v656, 1.442695
        %v659 = vpow.pop %v658
        %v660 = vmul.f32 %v657, 1.442695
        %v661 = vpow.pop %v660
        %v662 = vadd.f32 %v659, 1.0
        %v663 = vadd.f32 %v661, 1.0
        %v664 = vrcp.pop %v662
        %v665 = vmul.f32 1.0, %v664
        %v666 = vrcp.pop %v663
        %v667 = vmul.f32 1.0, %v666
        %v668 = vmul.f32 %v654, %v665
        %v669 = vmul.f32 %v655, %v667
        %672 = vrot.lane.b32.xlu0 %v668, 16
        %v673 = vpop.permute.xlu0 %672
        %674 = vrot.lane.b32.xlu0 %v669, 16
        %v675 = vpop.permute.xlu0 %674
        %v676 = vsel %vm181, %v673, %v675
        %v679 = vsel %vm181, 0.0, %v673
        %680 = vrot.lane.b32.xlu0 %v668, 112
        %v681 = vpop.permute.xlu0 %680
        %682 = vrot.lane.b32.xlu0 %v669, 112
        %v683 = vpop.permute.xlu0 %682
        %v684 = vsel %vm190, %v681, %v683
        %v687 = vsel %vm190, %v683, 0.0
        %688 = vset.pattern.permute.xlu0 27
        %689 = vperm.xlu0 %688, %v174
        %v690 = vpop.permute.xlu0 %689
        %v692 = vlaneseq
        %v693 = vshrl.u32 %v692, 7
        %v694 = vsub.s32 0, %v693
        %v695 = vrot.slane %v679, %v694
        %v696 = vlaneseq
        %v697 = vshrl.u32 %v696, 7
        %v698 = vsub.s32 0, %v697
        %v699 = vrot.slane %v676, %v698
        %v700 = vmul.f32 %v690, %v695
        %v701 = vmul.f32 %v690, %v699
        %702 = vset.pattern.permute.xlu0 28
        %703 = vperm.xlu0 %702, %v174
        %v704 = vpop.permute.xlu0 %703
        %v706 = vlaneseq
        %v707 = vshrl.u32 %v706, 7
        %v708 = vsub.s32 1, %v707
        %v709 = vrot.slane %v679, %v708
        %v710 = vlaneseq
        %v711 = vshrl.u32 %v710, 7
        %v712 = vsub.s32 1, %v711
        %v713 = vrot.slane %v676, %v712
        %v714 = vmul.f32 %v704, %v709
        %v715 = vmul.f32 %v704, %v713
        %v716 = vadd.f32 %v700, %v714
        %v717 = vadd.f32 %v701, %v715
        %718 = vset.pattern.permute.xlu0 29
        %719 = vperm.xlu0 %718, %v174
        %v720 = vpop.permute.xlu0 %719
        %v722 = vlaneseq
        %v723 = vshrl.u32 %v722, 7
        %v724 = vsub.s32 2, %v723
        %v725 = vrot.slane %v679, %v724
        %v726 = vlaneseq
        %v727 = vshrl.u32 %v726, 7
        %v728 = vsub.s32 2, %v727
        %v729 = vrot.slane %v676, %v728
        %v730 = vmul.f32 %v720, %v725
        %v731 = vmul.f32 %v720, %v729
        %v732 = vadd.f32 %v716, %v730
        %v733 = vadd.f32 %v717, %v731
        %734 = vset.pattern.permute.xlu0 30
        %735 = vperm.xlu0 %734, %v174
        %v736 = vpop.permute.xlu0 %735
        %v738 = vlaneseq
        %v739 = vshrl.u32 %v738, 7
        %v740 = vsub.s32 3, %v739
        %v741 = vrot.slane %v679, %v740
        %v742 = vlaneseq
        %v743 = vshrl.u32 %v742, 7
        %v744 = vsub.s32 3, %v743
        %v745 = vrot.slane %v676, %v744
        %v746 = vmul.f32 %v736, %v741
        %v747 = vmul.f32 %v736, %v745
        %v748 = vadd.f32 %v732, %v746
        %v749 = vadd.f32 %v733, %v747
        %750 = vset.pattern.permute.xlu0 31
        %751 = vperm.xlu0 %750, %v174
        %v752 = vpop.permute.xlu0 %751
        %v754 = vlaneseq
        %v755 = vshrl.u32 %v754, 7
        %v756 = vsub.s32 0, %v755
        %v757 = vrot.slane %v668, %v756
        %v758 = vlaneseq
        %v759 = vshrl.u32 %v758, 7
        %v760 = vsub.s32 0, %v759
        %v761 = vrot.slane %v669, %v760
        %v762 = vmul.f32 %v752, %v757
        %v763 = vmul.f32 %v752, %v761
        %v764 = vadd.f32 %v748, %v762
        %v765 = vadd.f32 %v749, %v763
        %766 = vset.pattern.permute.xlu0 32
        %767 = vperm.xlu0 %766, %v174
        %v768 = vpop.permute.xlu0 %767
        %v770 = vlaneseq
        %v771 = vshrl.u32 %v770, 7
        %v772 = vsub.s32 1, %v771
        %v773 = vrot.slane %v668, %v772
        %v774 = vlaneseq
        %v775 = vshrl.u32 %v774, 7
        %v776 = vsub.s32 1, %v775
        %v777 = vrot.slane %v669, %v776
        %v778 = vmul.f32 %v768, %v773
        %v779 = vmul.f32 %v768, %v777
        %v780 = vadd.f32 %v764, %v778
        %v781 = vadd.f32 %v765, %v779
        %782 = vset.pattern.permute.xlu0 33
        %783 = vperm.xlu0 %782, %v174
        %v784 = vpop.permute.xlu0 %783
        %v786 = vlaneseq
        %v787 = vshrl.u32 %v786, 7
        %v788 = vsub.s32 2, %v787
        %v789 = vrot.slane %v668, %v788
        %v790 = vlaneseq
        %v791 = vshrl.u32 %v790, 7
        %v792 = vsub.s32 2, %v791
        %v793 = vrot.slane %v669, %v792
        %v794 = vmul.f32 %v784, %v789
        %v795 = vmul.f32 %v784, %v793
        %v796 = vadd.f32 %v780, %v794
        %v797 = vadd.f32 %v781, %v795
        %798 = vset.pattern.permute.xlu0 34
        %799 = vperm.xlu0 %798, %v174
        %v800 = vpop.permute.xlu0 %799
        %v802 = vlaneseq
        %v803 = vshrl.u32 %v802, 7
        %v804 = vsub.s32 3, %v803
        %v805 = vrot.slane %v668, %v804
        %v806 = vlaneseq
        %v807 = vshrl.u32 %v806, 7
        %v808 = vsub.s32 3, %v807
        %v809 = vrot.slane %v669, %v808
        %v810 = vmul.f32 %v800, %v805
        %v811 = vmul.f32 %v800, %v809
        %v812 = vadd.f32 %v796, %v810
        %v813 = vadd.f32 %v797, %v811
        %814 = vset.pattern.permute.xlu0 35
        %815 = vperm.xlu0 %814, %v174
        %v816 = vpop.permute.xlu0 %815
        %v818 = vlaneseq
        %v819 = vshrl.u32 %v818, 7
        %v820 = vsub.s32 0, %v819
        %v821 = vrot.slane %v684, %v820
        %v822 = vlaneseq
        %v823 = vshrl.u32 %v822, 7
        %v824 = vsub.s32 0, %v823
        %v825 = vrot.slane %v687, %v824
        %v826 = vmul.f32 %v816, %v821
        %v827 = vmul.f32 %v816, %v825
        %v828 = vadd.f32 %v812, %v826
        %v829 = vadd.f32 %v813, %v827
        %830 = vset.pattern.permute.xlu0 36
        %831 = vperm.xlu0 %830, %v174
        %v832 = vpop.permute.xlu0 %831
        %v834 = vlaneseq
        %v835 = vshrl.u32 %v834, 7
        %v836 = vsub.s32 1, %v835
        %v837 = vrot.slane %v684, %v836
        %v838 = vlaneseq
        %v839 = vshrl.u32 %v838, 7
        %v840 = vsub.s32 1, %v839
        %v841 = vrot.slane %v687, %v840
        %v842 = vmul.f32 %v832, %v837
        %v843 = vmul.f32 %v832, %v841
        %v844 = vadd.f32 %v828, %v842
        %v845 = vadd.f32 %v829, %v843
        %846 = vset.pattern.permute.xlu0 37
        %847 = vperm.xlu0 %846, %v174
        %v848 = vpop.permute.xlu0 %847
        %v850 = vlaneseq
        %v851 = vshrl.u32 %v850, 7
        %v852 = vsub.s32 2, %v851
        %v853 = vrot.slane %v684, %v852
        %v854 = vlaneseq
        %v855 = vshrl.u32 %v854, 7
        %v856 = vsub.s32 2, %v855
        %v857 = vrot.slane %v687, %v856
        %v858 = vmul.f32 %v848, %v853
        %v859 = vmul.f32 %v848, %v857
        %v860 = vadd.f32 %v844, %v858
        %v861 = vadd.f32 %v845, %v859
        %862 = vset.pattern.permute.xlu0 38
        %863 = vperm.xlu0 %862, %v174
        %v864 = vpop.permute.xlu0 %863
        %v866 = vlaneseq
        %v867 = vshrl.u32 %v866, 7
        %v868 = vsub.s32 3, %v867
        %v869 = vrot.slane %v684, %v868
        %v870 = vlaneseq
        %v871 = vshrl.u32 %v870, 7
        %v872 = vsub.s32 3, %v871
        %v873 = vrot.slane %v687, %v872
        %v874 = vmul.f32 %v864, %v869
        %v875 = vmul.f32 %v864, %v873
        %v876 = vadd.f32 %v860, %v874
        %v877 = vadd.f32 %v861, %v875
        %878 = vset.pattern.permute.xlu0 39
        %879 = vperm.xlu0 %878, %v174
        %v880 = vpop.permute.xlu0 %879
        %v882 = vadd.f32 %v876, %v880
        %v883 = vadd.f32 %v877, %v880
        %v884 = vxor.u32 %v882, 2147483648
        %v885 = vxor.u32 %v883, 2147483648
        %v886 = vmul.f32 %v884, 1.442695
        %v887 = vpow.pop %v886
        %v888 = vmul.f32 %v885, 1.442695
        %v889 = vpow.pop %v888
        %v890 = vadd.f32 %v887, 1.0
        %v891 = vadd.f32 %v889, 1.0
        %v892 = vrcp.pop %v890
        %v893 = vmul.f32 1.0, %v892
        %v894 = vrcp.pop %v891
        %v895 = vmul.f32 1.0, %v894
        %v896 = vmul.f32 %v882, %v893
        %v897 = vmul.f32 %v883, %v895
        %v899 = vadd.f32 %v896, %v173
        %v900 = vadd.f32 %v897, %v176
        %v903 = vcombine.low %v899, %v900
        %905 = vst [vmem:[%s172] sm:$0xff] %v903
        %s906 = sand.u32 %s75, 1
        %s907 = scalar_lea.sflag [#allocation4], %s906
        %s908 = sand.u32 %s75, 1
        %s909 = smul.addr %s908, 8
        %s910 = scalar_lea.vmem [#allocation7], %s909
        // Predicated region
        $region37: #{tpu_custom_call.1} parent=27 // pred_check
          %p911 = pneg %p85
        $region38: #{tpu_custom_call.1} parent=27 // pred_check_branch
          %913 = sbr.rel (%p911) target = $region40
        $region39: #{tpu_custom_call.1} parent=27 // pred_region
          %s915 = ssub.s32 128, 128
          %916 = vsyncadd %s907, %s915
          %s917 = smul.addr %s20, 2
          %s918 = smul.addr %s917, 64
          %s919 = scalar_lea.hbm %s2, %s918
          %s921 = sshll.u32 %s910, 4
          %s922 = int_to_ptr.vmem [resolvable:$true] %s921
          %924 = dma.vmem_to_hbm [thread:$0]  %s922, 128, %s919, %s907
        $region40: #{tpu_custom_call.1} parent=27 // pred_fallthru
          _
      $region28: #{tpu_custom_call.1} parent=5 // pred_fallthru
        _
      %p925 = scmp.le.s32.totalorder 2, %s15
      // Predicated region
      $region41: #{tpu_custom_call.1} parent=5 // pred_check
        %p926 = pneg %p925
      $region42: #{tpu_custom_call.1} parent=5 // pred_check_branch
        %928 = sbr.rel (%p926) target = $region44
      $region43: #{tpu_custom_call.1} parent=5 // pred_region
        %s929 = ssub.s32 %s15, 2
        // Predicated region
        $region45: #{tpu_custom_call.1} parent=43 // pred_check
          %p930 = pneg %p91
        $region46: #{tpu_custom_call.1} parent=43 // pred_check_branch
          %932 = sbr.rel (%p930) target = $region48
        $region47: #{tpu_custom_call.1} parent=43 // pred_region
          %s933 = sand.u32 %s76, 1
          %s934 = scalar_lea.sflag [#allocation4], %s933
          %s935 = sand.u32 %s76, 1
          %s936 = smul.addr %s935, 8
          %s937 = scalar_lea.vmem [#allocation7], %s936
          %938 = dma.done %s934, 128
        $region48: #{tpu_custom_call.1} parent=43 // pred_fallthru
          _
      $region44: #{tpu_custom_call.1} parent=5 // pred_fallthru
        _
    $region6: #{tpu_custom_call.1} parent=1 // loop_footer
      %s19 = sadd.s32 1, %s15
    $region7: #{tpu_custom_call.1} parent=1 // loop_footer_branch
      %14 = sbr.rel target = $region3
    $region8: #{tpu_custom_call.1} parent=1 // loop_exit
      _
    %939 = vsyncpa [#allocation3], 1
    %s940 = scalar_lea.sflag [#allocation3], 1
    %941 = vsyncpa %s940, 1
    %942 = vsyncpa [#allocation6], 1
    %943 = vsyncpa [#allocation4], 1
    %s944 = scalar_lea.sflag [#allocation4], 1
    %945 = vsyncpa %s944, 1

</llo_original>
